<compile_context>
chip_gen: v5e
topology: v5e:2x2
jax: 0.10.0
libtpu: 0.0.40
codegen_flags: <defaults>
</compile_context>

<pallas_src>
import jax
import jax.numpy as jnp
import numpy as np
from jax import lax
from jax.experimental import pallas as pl
from jax.experimental.pallas import tpu as pltpu


# --------------------------- Pallas kernels ---------------------------------

def _conv1x1_relu_kernel(x_ref, w_ref, b_ref, o_ref):
    # x: (TM, Cin)  w: (Cin, F)  b: (1, F)  o: (TM, F)
    y = jnp.dot(x_ref[...], w_ref[...], preferred_element_type=jnp.float32)
    o_ref[...] = jnp.maximum(y + b_ref[...], 0.0)


def _fused_level_kernel(prev_ref, x_ref, w1_ref, b1_ref, w3_ref, b3_ref,
                        o_ref, mid_ref, cols_ref):
    """One full FPN level, fused:   out = relu(conv3x3(pool2(prev) + relu(conv1x1(x))))

    prev_ref: (4*H*W, F)   previous pyramid level, one image, flattened NHWC rows
    x_ref:    (H*W, Cin)   lateral input, one image, flattened NHWC rows
    w1_ref:   (Cin, F)     1x1 conv weight              b1_ref: (1, F)
    w3_ref:   (9*F, F)     3x3 conv weight, rows ordered (kh, kw, c)   b3_ref: (1, F)
    o_ref:    (H*W, F)
    mid_ref:  (H+2, W+2, F)  VMEM scratch — zero-padded fused intermediate
    cols_ref: (H*W, 9*F)     VMEM scratch — im2col slab for a single K=9F matmul
    """
    Hp2, Wp2, F = mid_ref.shape
    H, W = Hp2 - 2, Wp2 - 2
    HW = H * W

    # ---- 2x2 max-pool of the previous level, in-kernel on the VPU ----------
    # prev rows are flattened row-major over (2H, 2W): adjacent rows pair over W.
    p = prev_ref[...]                                    # (4*HW, F)
    pw = jnp.max(p.reshape(2 * HW, 2, F), axis=1)        # (2*HW, F)  pooled over W
    pooled = jnp.max(pw.reshape(H, 2, W, F), axis=1)     # (H, W, F)  pooled over H

    # ---- 1x1 conv + ReLU of the lateral input (MXU) -------------------------
    lat = jnp.dot(x_ref[...], w1_ref[...], preferred_element_type=jnp.float32)
    lat = jnp.maximum(lat + b1_ref[...], 0.0).reshape(H, W, F)

    # ---- zero-pad (pool + lateral) into VMEM scratch (no jnp.pad in HBM) ----
    mid_ref[...] = jnp.zeros_like(mid_ref)
    mid_ref[1:H + 1, 1:W + 1, :] = pooled + lat
    mid = mid_ref[...]                                   # (H+2, W+2, F)

    # ---- 3x3 conv: im2col slab + ONE K=9F matmul (fills MXU contraction) ----
    for t in range(9):
        dh, dw = t // 3, t % 3
        cols_ref[:, t * F:(t + 1) * F] = (
            mid[dh:dh + H, dw:dw + W, :].reshape(HW, F))
    y = jnp.dot(cols_ref[...], w3_ref[...], preferred_element_type=jnp.float32)
    o_ref[...] = jnp.maximum(y + b3_ref[...], 0.0)


# --------------------------- wrappers ----------------------------------------

def _row_tile(M, target=512):
    """Largest row tile that divides M, is a multiple of 8, is <= target and,
    when possible, leaves >= 2 grid steps (keeps both v7x TensorCores busy)."""
    divisors = [t for t in range(8, min(M, target) + 1, 8) if M % t == 0]
    if not divisors:
        return M
    multi = [t for t in divisors if M // t >= 2]
    return max(multi) if multi else max(divisors)


def conv1x1_relu(x_nhwc, w, b):
    N, H, W, Cin = x_nhwc.shape
    F = w.shape[1]
    M = N * H * W
    tm = _row_tile(M)
    x2d = x_nhwc.reshape(M, Cin)                 # free metadata reshape
    out = pl.pallas_call(
        _conv1x1_relu_kernel,
        out_shape=jax.ShapeDtypeStruct((M, F), jnp.float32),
        grid=(M // tm,),
        in_specs=[pl.BlockSpec((tm, Cin), lambda i: (i, 0)),
                  pl.BlockSpec((Cin, F), lambda i: (0, 0)),
                  pl.BlockSpec((1, F), lambda i: (0, 0))],
        out_specs=pl.BlockSpec((tm, F), lambda i: (i, 0)),
        compiler_params=pltpu.CompilerParams(dimension_semantics=("parallel",)),
    )(x2d, w, b)
    return out.reshape(N, H, W, F)


def fused_level(prev_nhwc, x_nhwc, w1, b1, w33, b3):
    """relu(conv3x3( maxpool2x2(prev) + relu(conv1x1(x)) )) in one pallas_call."""
    N, H2, W2, F = prev_nhwc.shape
    Nx, H, W, Cin = x_nhwc.shape
    assert Nx == N and H2 == 2 * H and W2 == 2 * W and w33.shape == (3, 3, F, F)
    HW = H * W
    prev2d = prev_nhwc.reshape(N * 4 * HW, F)    # free metadata reshapes
    x2d = x_nhwc.reshape(N * HW, Cin)
    w3r = w33.reshape(9 * F, F)                  # rows ordered (kh, kw, c)
    # Grid over batch (>= 2 steps -> both v7x TensorCores get work).
    # NOTE: for production FPN sizes, additionally tile over H with a 1-row
    # halo so per-step VMEM stays bounded on v7x (64 MiB).
    out = pl.pallas_call(
        _fused_level_kernel,
        out_shape=jax.ShapeDtypeStruct((N * HW, F), jnp.float32),
        grid=(N,),
        in_specs=[pl.BlockSpec((4 * HW, F), lambda n: (n, 0)),
                  pl.BlockSpec((HW, Cin), lambda n: (n, 0)),
                  pl.BlockSpec((Cin, F), lambda n: (0, 0)),
                  pl.BlockSpec((1, F), lambda n: (0, 0)),
                  pl.BlockSpec((9 * F, F), lambda n: (0, 0)),
                  pl.BlockSpec((1, F), lambda n: (0, 0))],
        out_specs=pl.BlockSpec((HW, F), lambda n: (n, 0)),
        scratch_shapes=[pltpu.VMEM((H + 2, W + 2, F), jnp.float32),
                        pltpu.VMEM((HW, 9 * F), jnp.float32)],
        compiler_params=pltpu.CompilerParams(dimension_semantics=("parallel",)),
    )(prev2d, x2d, w1, b1, w3r, b3)
    return out.reshape(N, H, W, F)


# --------------------------- PyramidFeatures forward -------------------------

def pyramid_features_forward(params, C3, C4, C5):
    """Inputs in NHWC.  Returns P5_x (NHWC), matching the PyTorch forward."""
    P3 = conv1x1_relu(C3, params["p3_1_w"], params["p3_1_b"])
    P4 = fused_level(P3, C4, params["p4_1_w"], params["p4_1_b"],
                     params["p4_3_w"], params["p4_3_b"])
    P5 = fused_level(P4, C5, params["p5_1_w"], params["p5_1_b"],
                     params["p5_3_w"], params["p5_3_b"])
    return P5


# --------------------------- pure-JAX reference ------------------------------

def reference_forward(params, C3, C4, C5):
    hp = lax.Precision.HIGHEST

    def conv1x1(x, w, b):
        return jnp.maximum(jnp.einsum("nhwc,cf->nhwf", x, w, precision=hp) + b, 0.0)

    def pool(x):
        N, H, W, C = x.shape
        return jnp.max(x.reshape(N, H // 2, 2, W // 2, 2, C), axis=(2, 4))

    def conv3x3(x, w, b):
        y = lax.conv_general_dilated(
            x, w, (1, 1), "SAME",
            dimension_numbers=("NHWC", "HWIO", "NHWC"), precision=hp)
        return jnp.maximum(y + b, 0.0)

    P3 = conv1x1(C3, params["p3_1_w"], params["p3_1_b"])
    P4 = pool(P3) + conv1x1(C4, params["p4_1_w"], params["p4_1_b"])
    P4 = conv3x3(P4, params["p4_3_w"], params["p4_3_b"])
    P5 = pool(P4) + conv1x1(C5, params["p5_1_w"], params["p5_1_b"])
    P5 = conv3x3(P5, params["p5_3_w"], params["p5_3_b"])
    return P5


# --------------------------- parameter init ----------------------------------

def init_params(key, C3_size, C4_size, C5_size, feature_size):
    ks = jax.random.split(key, 10)

    def u(k, shape, fan_in):
        bound = 1.0 / np.sqrt(fan_in)
        return jax.random.uniform(k, shape, jnp.float32, -bound, bound)

    F = feature_size
    return {
        # 1x1 convs stored as (Cin, Cout); 3x3 convs stored HWIO (3,3,Cin,Cout)
        "p3_1_w": u(ks[0], (C3_size, F), C3_size),
        "p3_1_b": u(ks[1], (1, F), C3_size),
        "p4_1_w": u(ks[2], (C4_size, F), C4_size),
        "p4_1_b": u(ks[3], (1, F), C4_size),
        "p4_3_w": u(ks[4], (3, 3, F, F), 9 * F),
        "p4_3_b": u(ks[5], (1, F), 9 * F),
        "p5_1_w": u(ks[6], (C5_size, F), C5_size),
        "p5_1_b": u(ks[7], (1, F), C5_size),
        "p5_3_w": u(ks[8], (3, 3, F, F), 9 * F),
        "p5_3_b": u(ks[9], (1, F), 9 * F),
    }


# --------------------------- main ---------------------------------------------

if __name__ == "__main__":
    N = 2
    # feature_size kept at a multiple of 128 so every output store is lane-dense.
    C3_size, C4_size, C5_size, feature_size = 4, 6, 8, 128
    H3 = W3 = 16

    key = jax.random.PRNGKey(0)
    k1, k2, k3, kp = jax.random.split(key, 4)

    # PyTorch-convention NCHW inputs
    C3_nchw = jax.random.normal(k1, (N, C3_size, H3, W3), jnp.float32)
    C4_nchw = jax.random.normal(k2, (N, C4_size, H3 // 2, W3 // 2), jnp.float32)
    C5_nchw = jax.random.normal(k3, (N, C5_size, H3 // 4, W3 // 4), jnp.float32)

    # glue: NCHW -> NHWC for the kernels
    C3 = jnp.transpose(C3_nchw, (0, 2, 3, 1))
    C4 = jnp.transpose(C4_nchw, (0, 2, 3, 1))
    C5 = jnp.transpose(C5_nchw, (0, 2, 3, 1))

    params = init_params(kp, C3_size, C4_size, C5_size, feature_size)

    out = pyramid_features_forward(params, C3, C4, C5)
    out = jax.block_until_ready(out)

    ref = reference_forward(params, C3, C4, C5)
    np.testing.assert_allclose(np.asarray(out), np.asarray(ref),
                               rtol=1e-3, atol=1e-3)
    print("KERNEL_OK")
</pallas_src>

<mosaic_0001>
module attributes {stable_mosaic.version = 11 : i64} {
  func.func @_conv1x1_relu_kernel(%arg0: i32, %arg1: memref<256x4xf32, #tpu.memory_space<vmem>>, %arg2: memref<4x128xf32, #tpu.memory_space<vmem>>, %arg3: memref<1x128xf32, #tpu.memory_space<vmem>>, %arg4: memref<256x128xf32, #tpu.memory_space<vmem>>) attributes {dimension_semantics = [#tpu.dimension_semantics<parallel>], iteration_bounds = array<i64: 2>, scalar_prefetch = 0 : i64, scratch_operands = 0 : i64, tpu.core_type = #tpu.core_type<tc>, window_params = [{transform_indices = @transform_0, window_bounds = array<i64: 256, 4>}, {pipeline_mode = #tpu.pipeline_mode<synchronous>, transform_indices = @transform_1, window_bounds = array<i64: 4, 128>}, {pipeline_mode = #tpu.pipeline_mode<synchronous>, transform_indices = @transform_2, window_bounds = array<i64: 1, 128>}, {transform_indices = @transform_3, window_bounds = array<i64: 256, 128>}]} {
    %c0 = arith.constant 0 : index
    %c0_0 = arith.constant 0 : index
    %0 = vector.load %arg1[%c0, %c0_0] : memref<256x4xf32, #tpu.memory_space<vmem>>, vector<256x4xf32>
    %c0_1 = arith.constant 0 : index
    %c0_2 = arith.constant 0 : index
    %1 = vector.load %arg2[%c0_1, %c0_2] : memref<4x128xf32, #tpu.memory_space<vmem>>, vector<4x128xf32>
    %cst = arith.constant dense<0.000000e+00> : vector<256x128xf32>
    %2 = tpu.matmul %0, %1, %cst {dimension_numbers = #tpu.dot_dimension_numbers<[1], [0], [0], [1], [0, 0, 1, 1], [], []>} : vector<256x4xf32>, vector<4x128xf32>, vector<256x128xf32> -> vector<256x128xf32>
    %c0_3 = arith.constant 0 : index
    %c0_4 = arith.constant 0 : index
    %3 = vector.load %arg3[%c0_3, %c0_4] : memref<1x128xf32, #tpu.memory_space<vmem>>, vector<1x128xf32>
    %4 = vector.broadcast %3 : vector<1x128xf32> to vector<256x128xf32>
    %5 = arith.addf %2, %4 : vector<256x128xf32>
    %cst_5 = arith.constant 0.000000e+00 : f32
    %6 = vector.broadcast %cst_5 : f32 to vector<256x128xf32>
    %7 = arith.maximumf %5, %6 : vector<256x128xf32>
    %c0_6 = arith.constant 0 : index
    %c0_7 = arith.constant 0 : index
    %8 = vector.load %arg4[%c0_6, %c0_7] : memref<256x128xf32, #tpu.memory_space<vmem>>, vector<256x128xf32>
    tpu.vector_store %arg4[%c0_6, %c0_7], %7 {strides = array<i32>} : memref<256x128xf32, #tpu.memory_space<vmem>>, vector<256x128xf32>,
    return
  }
  func.func @transform_0(%arg0: i32) -> (i32, i32) {
    %c0_i32 = arith.constant 0 : i32
    %c0_i32_0 = arith.constant 0 : i32
    return %arg0, %c0_i32 : i32, i32
  }
  func.func @transform_1(%arg0: i32) -> (i32, i32) {
    %c0_i32 = arith.constant 0 : i32
    %c0_i32_0 = arith.constant 0 : i32
    %c0_i32_1 = arith.constant 0 : i32
    return %c0_i32, %c0_i32_0 : i32, i32
  }
  func.func @transform_2(%arg0: i32) -> (i32, i32) {
    %c0_i32 = arith.constant 0 : i32
    %c0_i32_0 = arith.constant 0 : i32
    %c0_i32_1 = arith.constant 0 : i32
    return %c0_i32, %c0_i32_0 : i32, i32
  }
  func.func @transform_3(%arg0: i32) -> (i32, i32) {
    %c0_i32 = arith.constant 0 : i32
    %c0_i32_0 = arith.constant 0 : i32
    return %arg0, %c0_i32 : i32, i32
  }
}

</mosaic_0001>

<llo_original>
// kernel: tpu_custom_call.1
$region0: #{tpu_custom_call.1}
  #allocation0 [shape = 'u32[]', space=smem, size = 0x4, offset = 0x4, fixed_abs, tag = 'smem constant byte address 0x4 - core index']
  #allocation1 [shape = 'u32[72,128]{1,0:T(1,128)}', space=vmem, size = 0x9000, scoped, tag = 'internal scratch']
  %s0 = inlined_call_operand.vmem [shape: f32[512,4], index: 0, kind: input, shape index: {}]
  %s1 = inlined_call_operand.vmem [shape: f32[4,128], index: 1, kind: input, shape index: {}]
  %s2 = inlined_call_operand.vmem [shape: f32[1,128], index: 2, kind: input, shape index: {}]
  %s3 = inlined_call_operand.hbm [shape: f32[512,128], index: 3, kind: output, shape index: {}]
  %s4 = sld [smem:[#allocation0]]
  $region45: #{tpu_custom_call.1} parent=0
    _
  %s6 = ssub.s32 1, %s4
  %s7 = scalar_select 0, %s6, %s4
  $region1: #{tpu_custom_call.1} parent=0
    #allocation2 [shape = 'u8[262144]{0}', space=vmem, size = 0x40000, scoped, tag = 'output window, operand 0']
    #allocation3 [shape = 's32[2]{0}', space=sflag, size = 0x8, scoped, tag = 'scoped memory for tpu_custom_call.1']
    %8 = vsyncpa [#allocation3], 0
    %s9 = scalar_lea.sflag [#allocation3], 1
    %10 = vsyncpa %s9, 0
    loop: start=0, step=1, limit=4
    $region2: #{tpu_custom_call.1} parent=1 // loop_pre_header
      _
    $region3: #{tpu_custom_call.1} parent=1 // loop_header
      %s12 = sphi 0, %s16
      %p13 = scmp.ge.s32.totalorder %s12, 4
      %s22 = sphi 0, %s24
      %s25 = sphi 0, %s22
      %s26 = sphi 0, %s25
      %s42 = sphi 0, %s26
      %s46 = sphi 0, %s46
      %s48 = sphi 0, %s46
      %s49 = sphi 0, %s48
      %s63 = sphi 0, %s49
      %s67 = sphi 0, %s67
      %s69 = sphi 0, %s67
      %s70 = sphi 0, %s69
      %s84 = sphi 0, %s70
      %s90 = sphi 0, %s92
      %s93 = sphi 0, %s90
      %s94 = sphi 0, %s93
      %s110 = sphi 0, %s94
    $region4: #{tpu_custom_call.1} parent=1 // loop_header_branch
      %15 = sbr.rel (%p13) target = $region8
    $region5: #{tpu_custom_call.1} parent=1 // loop_body
      %s17 = ssub.s32 %s12, 1
      %s18 = ssub.s32 %s12, 2
      %s19 = sadd.s32 %s12, 1
      %s20 = ssub.s32 %s12, %s19
      %p21 = scmp.eq.s32.totalorder %s20, 0
      %s23 = sadd.s32 %s22, 1
      %s24 = scalar_select %p21, %s22, %s23
      %p27 = pneg %p21
      %p28 = scmp.eq.s32.totalorder %s12, 1
      %p29 = por %p27, %p28
      %p30 = scmp.ne.s32.totalorder %s22, %s25
      %p31 = scmp.eq.s32.totalorder %s12, 0
      %p32 = por %p30, %p31
      %p33 = scmp.ne.s32.totalorder %s22, %s25
      %p34 = scmp.eq.s32.totalorder %s17, 1
      %p35 = por %p33, %p34
      %p36 = scmp.ne.s32.totalorder %s25, %s26
      %p37 = scmp.eq.s32.totalorder %s17, 0
      %p38 = por %p36, %p37
      %p39 = scmp.ne.s32.totalorder %s25, %s26
      %p40 = scmp.eq.s32.totalorder %s18, 1
      %p41 = por %p39, %p40
      %p43 = scmp.ne.s32.totalorder %s26, %s42
      %p44 = scmp.eq.s32.totalorder %s18, 0
      %p45 = por %p43, %p44
      %s47 = sadd.s32 %s46, 1
      %p50 = scmp.eq.s32.totalorder %s12, 1
      %p51 = scmp.ne.s32.totalorder %s46, %s48
      %p52 = scmp.eq.s32.totalorder %s12, 0
      %p53 = por %p51, %p52
      %p54 = scmp.ne.s32.totalorder %s46, %s48
      %p55 = scmp.eq.s32.totalorder %s17, 1
      %p56 = por %p54, %p55
      %p57 = scmp.ne.s32.totalorder %s48, %s49
      %p58 = scmp.eq.s32.totalorder %s17, 0
      %p59 = por %p57, %p58
      %p60 = scmp.ne.s32.totalorder %s48, %s49
      %p61 = scmp.eq.s32.totalorder %s18, 1
      %p62 = por %p60, %p61
      %p64 = scmp.ne.s32.totalorder %s49, %s63
      %p65 = scmp.eq.s32.totalorder %s18, 0
      %p66 = por %p64, %p65
      %s68 = sadd.s32 %s67, 1
      %p71 = scmp.eq.s32.totalorder %s12, 1
      %p72 = scmp.ne.s32.totalorder %s67, %s69
      %p73 = scmp.eq.s32.totalorder %s12, 0
      %p74 = por %p72, %p73
      %p75 = scmp.ne.s32.totalorder %s67, %s69
      %p76 = scmp.eq.s32.totalorder %s17, 1
      %p77 = por %p75, %p76
      %p78 = scmp.ne.s32.totalorder %s69, %s70
      %p79 = scmp.eq.s32.totalorder %s17, 0
      %p80 = por %p78, %p79
      %p81 = scmp.ne.s32.totalorder %s69, %s70
      %p82 = scmp.eq.s32.totalorder %s18, 1
      %p83 = por %p81, %p82
      %p85 = scmp.ne.s32.totalorder %s70, %s84
      %p86 = scmp.eq.s32.totalorder %s18, 0
      %p87 = por %p85, %p86
      %s88 = ssub.s32 %s12, %s19
      %p89 = scmp.eq.s32.totalorder %s88, 0
      %s91 = sadd.s32 %s90, 1
      %s92 = scalar_select %p89, %s90, %s91
      %p95 = pneg %p89
      %p96 = scmp.eq.s32.totalorder %s12, 1
      %p97 = por %p95, %p96
      %p98 = scmp.ne.s32.totalorder %s90, %s93
      %p99 = scmp.eq.s32.totalorder %s12, 0
      %p100 = por %p98, %p99
      %p101 = scmp.ne.s32.totalorder %s90, %s93
      %p102 = scmp.eq.s32.totalorder %s17, 1
      %p103 = por %p101, %p102
      %p104 = scmp.ne.s32.totalorder %s93, %s94
      %p105 = scmp.eq.s32.totalorder %s17, 0
      %p106 = por %p104, %p105
      %p107 = scmp.ne.s32.totalorder %s93, %s94
      %p108 = scmp.eq.s32.totalorder %s18, 1
      %p109 = por %p107, %p108
      %p111 = scmp.ne.s32.totalorder %s94, %s110
      %p112 = scmp.eq.s32.totalorder %s18, 0
      %p113 = por %p111, %p112
      %p114 = scmp.le.s32.totalorder 1, %s12
      %p115 = scmp.lt.s32.totalorder %s12, 3
      %p116 = pnand %p114, %p115
      %p117 = pneg %p116
      // Predicated region
      $region9: #{tpu_custom_call.1} parent=5 // pred_check
        _
      $region10: #{tpu_custom_call.1} parent=5 // pred_check_branch
        %119 = sbr.rel (%p116) target = $region12
      $region11: #{tpu_custom_call.1} parent=5 // pred_region
        %s120 = ssub.s32 %s12, 1
        // Predicated region
        $region13: #{tpu_custom_call.1} parent=11 // pred_check
          %p121 = pneg %p59
        $region14: #{tpu_custom_call.1} parent=11 // pred_check_branch
          %123 = sbr.rel (%p121) target = $region16
        $region15: #{tpu_custom_call.1} parent=11 // pred_region
          _
        $region16: #{tpu_custom_call.1} parent=11 // pred_fallthru
          _
        // Predicated region
        $region17: #{tpu_custom_call.1} parent=11 // pred_check
          %p124 = pneg %p80
        $region18: #{tpu_custom_call.1} parent=11 // pred_check_branch
          %126 = sbr.rel (%p124) target = $region20
        $region19: #{tpu_custom_call.1} parent=11 // pred_region
          _
        $region20: #{tpu_custom_call.1} parent=11 // pred_fallthru
          _
      $region12: #{tpu_custom_call.1} parent=5 // pred_fallthru
        _
      %p127 = scmp.lt.s32.totalorder %s12, 2
      // Predicated region
      $region21: #{tpu_custom_call.1} parent=5 // pred_check
        %p128 = pneg %p127
      $region22: #{tpu_custom_call.1} parent=5 // pred_check_branch
        %130 = sbr.rel (%p128) target = $region24
      $region23: #{tpu_custom_call.1} parent=5 // pred_region
        // Predicated region
        $region25: #{tpu_custom_call.1} parent=23 // pred_check
          %p131 = pneg %p32
        $region26: #{tpu_custom_call.1} parent=23 // pred_check_branch
          %133 = sbr.rel (%p131) target = $region28
        $region27: #{tpu_custom_call.1} parent=23 // pred_region
          %s134 = smul.u32 32, %s12
          %p135 = scmp.lt.s32.totalorder %s134, 63
          %s136 = scalar_select %p135, %s134, 63
          %s137 = smul.addr %s136, 8
          %s138 = scalar_lea.vmem %s0, %s137
          %s139 = smul.u32 32, %s12
        $region28: #{tpu_custom_call.1} parent=23 // pred_fallthru
          _
      $region24: #{tpu_custom_call.1} parent=5 // pred_fallthru
        _
      %p140 = scmp.le.s32.totalorder 1, %s12
      %p141 = scmp.lt.s32.totalorder %s12, 3
      %p142 = pnand %p140, %p141
      %p143 = pneg %p142
      // Predicated region
      $region29: #{tpu_custom_call.1} parent=5 // pred_check
        _
      $region30: #{tpu_custom_call.1} parent=5 // pred_check_branch
        %145 = sbr.rel (%p142) target = $region32
      $region31: #{tpu_custom_call.1} parent=5 // pred_region
        %s146 = ssub.s32 %s12, 1
        %s147 = smul.u32 32, %s17
        %p148 = scmp.lt.s32.totalorder %s147, 63
        %s149 = scalar_select %p148, %s147, 63
        %s150 = smul.addr %s149, 8
        %s151 = scalar_lea.vmem %s0, %s150
        %p152 = pneg %p38
        %p153 = pneg %p35
        %p154 = pneg %p59
        %p155 = pneg %p56
        %p156 = pneg %p80
        %p157 = pneg %p77
        %p158 = pneg %p106
        %p159 = pneg %p103
        %s160 = sand.u32 %s93, 1
        %s161 = scalar_lea.sflag [#allocation3], %s160
        %s162 = sand.u32 %s93, 1
        %s163 = smul.addr %s162, 256
        %s164 = scalar_lea.vmem [#allocation2], %s163
        %s165 = smul.u32 32, %s17
        %p166 = scmp.lt.s32.totalorder %s165, 63
        %s167 = scalar_select %p166, %s165, 63
        %s168 = smul.addr %s167, 8
        %s169 = scalar_lea.vmem %s0, %s168
        %s170 = smul.u32 32, %s17
        %s171 = smul.u32 32, %s17
        %v172 = vld [vmem:[%s169] sm:$0xff]
        %v173 = vld [vmem:[%s169 + $0x8] sm:$0xff]
        %v174 = vld [vmem:[%s169 + $0x10] sm:$0xff]
        %v175 = vld [vmem:[%s169 + $0x18] sm:$0xff]
        %v176 = vld [vmem:[%s169 + $0x20] sm:$0xff]
        %v177 = vld [vmem:[%s169 + $0x28] sm:$0xff]
        %v178 = vld [vmem:[%s169 + $0x30] sm:$0xff]
        %v179 = vld [vmem:[%s169 + $0x38] sm:$0xff]
        %v180 = vld [vmem:[%s169 + $0x40] sm:$0xff]
        %v181 = vld [vmem:[%s169 + $0x48] sm:$0xff]
        %v182 = vld [vmem:[%s169 + $0x50] sm:$0xff]
        %v183 = vld [vmem:[%s169 + $0x58] sm:$0xff]
        %v184 = vld [vmem:[%s169 + $0x60] sm:$0xff]
        %v185 = vld [vmem:[%s169 + $0x68] sm:$0xff]
        %v186 = vld [vmem:[%s169 + $0x70] sm:$0xff]
        %v187 = vld [vmem:[%s169 + $0x78] sm:$0xff]
        %v188 = vld [vmem:[%s169 + $0x80] sm:$0xff]
        %v189 = vld [vmem:[%s169 + $0x88] sm:$0xff]
        %v190 = vld [vmem:[%s169 + $0x90] sm:$0xff]
        %v191 = vld [vmem:[%s169 + $0x98] sm:$0xff]
        %v192 = vld [vmem:[%s169 + $0xa0] sm:$0xff]
        %v193 = vld [vmem:[%s169 + $0xa8] sm:$0xff]
        %v194 = vld [vmem:[%s169 + $0xb0] sm:$0xff]
        %v195 = vld [vmem:[%s169 + $0xb8] sm:$0xff]
        %v196 = vld [vmem:[%s169 + $0xc0] sm:$0xff]
        %v197 = vld [vmem:[%s169 + $0xc8] sm:$0xff]
        %v198 = vld [vmem:[%s169 + $0xd0] sm:$0xff]
        %v199 = vld [vmem:[%s169 + $0xd8] sm:$0xff]
        %v200 = vld [vmem:[%s169 + $0xe0] sm:$0xff]
        %v201 = vld [vmem:[%s169 + $0xe8] sm:$0xff]
        %v202 = vld [vmem:[%s169 + $0xf0] sm:$0xff]
        %v203 = vld [vmem:[%s169 + $0xf8] sm:$0xff]
        %v204 = vld [vmem:[%s1] sm:$0xf]
        %v205 = vld [vmem:[%s2] sm:$0x1]
        %v207 = vperm.slane %v205, 0
        %vm209 = vcmask 31744
        %v211 = vsel %vm209, %v172, 0
        %v214 = vsel %vm209, %v173, 0
        %v217 = vsel %vm209, %v174, 0
        %v220 = vsel %vm209, %v175, 0
        %v223 = vsel %vm209, %v176, 0
        %v226 = vsel %vm209, %v177, 0
        %v229 = vsel %vm209, %v178, 0
        %v232 = vsel %vm209, %v179, 0
        %v235 = vsel %vm209, %v180, 0
        %v238 = vsel %vm209, %v181, 0
        %v241 = vsel %vm209, %v182, 0
        %v244 = vsel %vm209, %v183, 0
        %v247 = vsel %vm209, %v184, 0
        %v250 = vsel %vm209, %v185, 0
        %v253 = vsel %vm209, %v186, 0
        %v256 = vsel %vm209, %v187, 0
        %v259 = vsel %vm209, %v188, 0
        %v262 = vsel %vm209, %v189, 0
        %v265 = vsel %vm209, %v190, 0
        %v268 = vsel %vm209, %v191, 0
        %v271 = vsel %vm209, %v192, 0
        %v274 = vsel %vm209, %v193, 0
        %v277 = vsel %vm209, %v194, 0
        %v280 = vsel %vm209, %v195, 0
        %v283 = vsel %vm209, %v196, 0
        %v286 = vsel %vm209, %v197, 0
        %v289 = vsel %vm209, %v198, 0
        %v292 = vsel %vm209, %v199, 0
        %v295 = vsel %vm209, %v200, 0
        %v298 = vsel %vm209, %v201, 0
        %v301 = vsel %vm209, %v202, 0
        %v304 = vsel %vm209, %v203, 0
        %vm306 = vcmask 1043456
        %v308 = vsel %vm306, %v204, 0
        %310 = vmatpush.msra.mxu0 0.0
        %311 = vmatpush.msra.mxu0 0.0
        %312 = vmatpush.msra.mxu0 0.0
        %313 = vmatpush.msra.mxu0 0.0
        %314 = vmatpush.msra.mxu0 0.0
        %315 = vmatpush.msra.mxu0 0.0
        %316 = vmatpush.msra.mxu0 0.0
        %317 = vmatpush.msra.mxu0 0.0
        %318 = vmatpush.msra.mxu0 0.0
        %319 = vmatpush.msra.mxu0 0.0
        %320 = vmatpush.msra.mxu0 0.0
        %321 = vmatpush.msra.mxu0 0.0
        %322 = vmatpush.msra.mxu0 0.0
        %323 = vmatpush.msra.mxu0 0.0
        %324 = vmatpush.msra.mxu0 0.0
        %325 = vmatpush.msra.mxu0 %v308
        %326 = vmatmul.f32.gmra.mxu0 %v211
        %v327 = vpop.f32.mrf.mxu0
        %v328 = vadd.f32 %v207, %v327
        %329 = vmatmul.f32.gmra.mxu0 %v214
        %v330 = vpop.f32.mrf.mxu0
        %v331 = vadd.f32 %v207, %v330
        %332 = vmatmul.f32.gmra.mxu0 %v217
        %v333 = vpop.f32.mrf.mxu0
        %v334 = vadd.f32 %v207, %v333
        %335 = vmatmul.f32.gmra.mxu0 %v220
        %v336 = vpop.f32.mrf.mxu0
        %v337 = vadd.f32 %v207, %v336
        %338 = vmatmul.f32.gmra.mxu0 %v223
        %v339 = vpop.f32.mrf.mxu0
        %v340 = vadd.f32 %v207, %v339
        %341 = vmatmul.f32.gmra.mxu0 %v226
        %v342 = vpop.f32.mrf.mxu0
        %v343 = vadd.f32 %v207, %v342
        %344 = vmatmul.f32.gmra.mxu0 %v229
        %v345 = vpop.f32.mrf.mxu0
        %v346 = vadd.f32 %v207, %v345
        %347 = vmatmul.f32.gmra.mxu0 %v232
        %v348 = vpop.f32.mrf.mxu0
        %v349 = vadd.f32 %v207, %v348
        %350 = vmatmul.f32.gmra.mxu0 %v235
        %v351 = vpop.f32.mrf.mxu0
        %v352 = vadd.f32 %v207, %v351
        %353 = vmatmul.f32.gmra.mxu0 %v238
        %v354 = vpop.f32.mrf.mxu0
        %v355 = vadd.f32 %v207, %v354
        %356 = vmatmul.f32.gmra.mxu0 %v241
        %v357 = vpop.f32.mrf.mxu0
        %v358 = vadd.f32 %v207, %v357
        %359 = vmatmul.f32.gmra.mxu0 %v244
        %v360 = vpop.f32.mrf.mxu0
        %v361 = vadd.f32 %v207, %v360
        %362 = vmatmul.f32.gmra.mxu0 %v247
        %v363 = vpop.f32.mrf.mxu0
        %v364 = vadd.f32 %v207, %v363
        %365 = vmatmul.f32.gmra.mxu0 %v250
        %v366 = vpop.f32.mrf.mxu0
        %v367 = vadd.f32 %v207, %v366
        %368 = vmatmul.f32.gmra.mxu0 %v253
        %v369 = vpop.f32.mrf.mxu0
        %v370 = vadd.f32 %v207, %v369
        %371 = vmatmul.f32.gmra.mxu0 %v256
        %v372 = vpop.f32.mrf.mxu0
        %v373 = vadd.f32 %v207, %v372
        %374 = vmatmul.f32.gmra.mxu0 %v259
        %v375 = vpop.f32.mrf.mxu0
        %v376 = vadd.f32 %v207, %v375
        %377 = vmatmul.f32.gmra.mxu0 %v262
        %v378 = vpop.f32.mrf.mxu0
        %v379 = vadd.f32 %v207, %v378
        %380 = vmatmul.f32.gmra.mxu0 %v265
        %v381 = vpop.f32.mrf.mxu0
        %v382 = vadd.f32 %v207, %v381
        %383 = vmatmul.f32.gmra.mxu0 %v268
        %v384 = vpop.f32.mrf.mxu0
        %v385 = vadd.f32 %v207, %v384
        %386 = vmatmul.f32.gmra.mxu0 %v271
        %v387 = vpop.f32.mrf.mxu0
        %v388 = vadd.f32 %v207, %v387
        %389 = vmatmul.f32.gmra.mxu0 %v274
        %v390 = vpop.f32.mrf.mxu0
        %v391 = vadd.f32 %v207, %v390
        %392 = vmatmul.f32.gmra.mxu0 %v277
        %v393 = vpop.f32.mrf.mxu0
        %v394 = vadd.f32 %v207, %v393
        %395 = vmatmul.f32.gmra.mxu0 %v280
        %v396 = vpop.f32.mrf.mxu0
        %v397 = vadd.f32 %v207, %v396
        %398 = vmatmul.f32.gmra.mxu0 %v283
        %v399 = vpop.f32.mrf.mxu0
        %v400 = vadd.f32 %v207, %v399
        %401 = vmatmul.f32.gmra.mxu0 %v286
        %v402 = vpop.f32.mrf.mxu0
        %v403 = vadd.f32 %v207, %v402
        %404 = vmatmul.f32.gmra.mxu0 %v289
        %v405 = vpop.f32.mrf.mxu0
        %v406 = vadd.f32 %v207, %v405
        %407 = vmatmul.f32.gmra.mxu0 %v292
        %v408 = vpop.f32.mrf.mxu0
        %v409 = vadd.f32 %v207, %v408
        %410 = vmatmul.f32.gmra.mxu0 %v295
        %v411 = vpop.f32.mrf.mxu0
        %v412 = vadd.f32 %v207, %v411
        %413 = vmatmul.f32.gmra.mxu0 %v298
        %v414 = vpop.f32.mrf.mxu0
        %v415 = vadd.f32 %v207, %v414
        %416 = vmatmul.f32.gmra.mxu0 %v301
        %v417 = vpop.f32.mrf.mxu0
        %v418 = vadd.f32 %v207, %v417
        %419 = vmatmul.f32.gmra.mxu0 %v304
        %v420 = vpop.f32.mrf.mxu0
        %v421 = vadd.f32 %v207, %v420
        %422 = vdwg.mxu0
        %v423 = vmax.f32 %v328, 0.0
        %v424 = vmax.f32 %v331, 0.0
        %v425 = vmax.f32 %v334, 0.0
        %v426 = vmax.f32 %v337, 0.0
        %v427 = vmax.f32 %v340, 0.0
        %v428 = vmax.f32 %v343, 0.0
        %v429 = vmax.f32 %v346, 0.0
        %v430 = vmax.f32 %v349, 0.0
        %v431 = vmax.f32 %v352, 0.0
        %v432 = vmax.f32 %v355, 0.0
        %v433 = vmax.f32 %v358, 0.0
        %v434 = vmax.f32 %v361, 0.0
        %v435 = vmax.f32 %v364, 0.0
        %v436 = vmax.f32 %v367, 0.0
        %v437 = vmax.f32 %v370, 0.0
        %v438 = vmax.f32 %v373, 0.0
        %v439 = vmax.f32 %v376, 0.0
        %v440 = vmax.f32 %v379, 0.0
        %v441 = vmax.f32 %v382, 0.0
        %v442 = vmax.f32 %v385, 0.0
        %v443 = vmax.f32 %v388, 0.0
        %v444 = vmax.f32 %v391, 0.0
        %v445 = vmax.f32 %v394, 0.0
        %v446 = vmax.f32 %v397, 0.0
        %v447 = vmax.f32 %v400, 0.0
        %v448 = vmax.f32 %v403, 0.0
        %v449 = vmax.f32 %v406, 0.0
        %v450 = vmax.f32 %v409, 0.0
        %v451 = vmax.f32 %v412, 0.0
        %v452 = vmax.f32 %v415, 0.0
        %v453 = vmax.f32 %v418, 0.0
        %v454 = vmax.f32 %v421, 0.0
        %455 = vst [vmem:[%s164] sm:$0xff] %v423
        %456 = vst [vmem:[%s164 + $0x8] sm:$0xff] %v424
        %457 = vst [vmem:[%s164 + $0x10] sm:$0xff] %v425
        %458 = vst [vmem:[%s164 + $0x18] sm:$0xff] %v426
        %459 = vst [vmem:[%s164 + $0x20] sm:$0xff] %v427
        %460 = vst [vmem:[%s164 + $0x28] sm:$0xff] %v428
        %461 = vst [vmem:[%s164 + $0x30] sm:$0xff] %v429
        %462 = vst [vmem:[%s164 + $0x38] sm:$0xff] %v430
        %463 = vst [vmem:[%s164 + $0x40] sm:$0xff] %v431
        %464 = vst [vmem:[%s164 + $0x48] sm:$0xff] %v432
        %465 = vst [vmem:[%s164 + $0x50] sm:$0xff] %v433
        %466 = vst [vmem:[%s164 + $0x58] sm:$0xff] %v434
        %467 = vst [vmem:[%s164 + $0x60] sm:$0xff] %v435
        %468 = vst [vmem:[%s164 + $0x68] sm:$0xff] %v436
        %469 = vst [vmem:[%s164 + $0x70] sm:$0xff] %v437
        %470 = vst [vmem:[%s164 + $0x78] sm:$0xff] %v438
        %471 = vst [vmem:[%s164 + $0x80] sm:$0xff] %v439
        %472 = vst [vmem:[%s164 + $0x88] sm:$0xff] %v440
        %473 = vst [vmem:[%s164 + $0x90] sm:$0xff] %v441
        %474 = vst [vmem:[%s164 + $0x98] sm:$0xff] %v442
        %475 = vst [vmem:[%s164 + $0xa0] sm:$0xff] %v443
        %476 = vst [vmem:[%s164 + $0xa8] sm:$0xff] %v444
        %477 = vst [vmem:[%s164 + $0xb0] sm:$0xff] %v445
        %478 = vst [vmem:[%s164 + $0xb8] sm:$0xff] %v446
        %479 = vst [vmem:[%s164 + $0xc0] sm:$0xff] %v447
        %480 = vst [vmem:[%s164 + $0xc8] sm:$0xff] %v448
        %481 = vst [vmem:[%s164 + $0xd0] sm:$0xff] %v449
        %482 = vst [vmem:[%s164 + $0xd8] sm:$0xff] %v450
        %483 = vst [vmem:[%s164 + $0xe0] sm:$0xff] %v451
        %484 = vst [vmem:[%s164 + $0xe8] sm:$0xff] %v452
        %485 = vst [vmem:[%s164 + $0xf0] sm:$0xff] %v453
        %486 = vst [vmem:[%s164 + $0xf8] sm:$0xff] %v454
        %s487 = sand.u32 %s93, 1
        %s488 = scalar_lea.sflag [#allocation3], %s487
        %s489 = sand.u32 %s93, 1
        %s490 = smul.addr %s489, 256
        %s491 = scalar_lea.vmem [#allocation2], %s490
        // Predicated region
        $region33: #{tpu_custom_call.1} parent=31 // pred_check
          %p492 = pneg %p103
        $region34: #{tpu_custom_call.1} parent=31 // pred_check_branch
          %494 = sbr.rel (%p492) target = $region36
        $region35: #{tpu_custom_call.1} parent=31 // pred_region
          %s495 = smul.u32 32, %s17
          %497 = vsyncadd %s488, 0
          %s498 = smul.addr %s495, 8
          %s499 = scalar_lea.hbm %s3, %s498
          %s500 = sshll.u32 %s491, 4
          %s501 = int_to_ptr.vmem [resolvable:$true] %s500
          %s502 = sshll.u32 %s499, 4
          %s503 = int_to_ptr.hbm [resolvable:$true] %s502
          %508 = dma.vmem_to_hbm [thread:$0]  %s501, 4096, %s503, %s488, 128, 128, 8
        $region36: #{tpu_custom_call.1} parent=31 // pred_fallthru
          _
      $region32: #{tpu_custom_call.1} parent=5 // pred_fallthru
        _
      %p509 = scmp.le.s32.totalorder 2, %s12
      // Predicated region
      $region37: #{tpu_custom_call.1} parent=5 // pred_check
        %p510 = pneg %p509
      $region38: #{tpu_custom_call.1} parent=5 // pred_check_branch
        %512 = sbr.rel (%p510) target = $region40
      $region39: #{tpu_custom_call.1} parent=5 // pred_region
        %s513 = ssub.s32 %s12, 2
        // Predicated region
        $region41: #{tpu_custom_call.1} parent=39 // pred_check
          %p514 = pneg %p109
        $region42: #{tpu_custom_call.1} parent=39 // pred_check_branch
          %516 = sbr.rel (%p514) target = $region44
        $region43: #{tpu_custom_call.1} parent=39 // pred_region
          %s517 = sand.u32 %s94, 1
          %s518 = scalar_lea.sflag [#allocation3], %s517
          %s519 = sand.u32 %s94, 1
          %s520 = smul.addr %s519, 256
          %s521 = scalar_lea.vmem [#allocation2], %s520
          %523 = dma.done %s518, 4096
        $region44: #{tpu_custom_call.1} parent=39 // pred_fallthru
          _
      $region40: #{tpu_custom_call.1} parent=5 // pred_fallthru
        _
    $region6: #{tpu_custom_call.1} parent=1 // loop_footer
      %s16 = sadd.s32 1, %s12
    $region7: #{tpu_custom_call.1} parent=1 // loop_footer_branch
      %11 = sbr.rel target = $region3
    $region8: #{tpu_custom_call.1} parent=1 // loop_exit
      _
    %524 = vsyncpa [#allocation3], 1
    %s525 = scalar_lea.sflag [#allocation3], 1
    %526 = vsyncpa %s525, 1

</llo_original>
